<compile_context>
chip_gen: v5e
topology: v5e:2x2
jax: 0.10.0
libtpu: 0.0.40
codegen_flags: <defaults>
</compile_context>

<pallas_src>
import math
import jax
import jax.numpy as jnp
from jax import lax
from jax.experimental import pallas as pl
from jax.experimental.pallas import tpu as pltpu


def _round_up(x, m):
    return ((x + m - 1) // m) * m


def build_nac_fused_kernel(num_layers, compute_dtype, persist_weights):
    """Fused kernel body for a fixed number of layers (statically unrolled)."""

    def compose_weff_T(whT_refs, mhT_refs):
        # W_eff^T = W_0^T @ W_1^T @ ... @ W_{L-1}^T   (shape [in0, out_pad])
        # with W_l = tanh(W_hat_l) * sigmoid(M_hat_l). Weights arrive already
        # transposed ([in_l, out_l]) so every contraction is canonical (1,0):
        # no XLU transposes anywhere in the kernel.
        wT = None
        for l in range(num_layers):
            whT = whT_refs[l][...]
            mhT = mhT_refs[l][...]
            # sigmoid(m) == 0.5*tanh(0.5*m) + 0.5 : one EUP transcendental.
            g = jnp.tanh(whT) * (0.5 * jnp.tanh(0.5 * mhT) + 0.5)
            if wT is None:
                wT = g
            else:
                wT = lax.dot_general(
                    wT, g,
                    dimension_numbers=(((1,), (0,)), ((), ())),
                    preferred_element_type=jnp.float32)
        return wT.astype(compute_dtype)

    def kernel(x_ref, *refs):
        whT_refs = refs[0:2 * num_layers:2]
        mhT_refs = refs[1:2 * num_layers:2]
        y_ref = refs[2 * num_layers]

        if persist_weights:
            # Compose the effective weight once (first batch tile) into VMEM
            # scratch; reused by every subsequent tile. Requires the batch axis
            # to be "arbitrary" (sequential) -- see compiler_params below.
            w_scr = refs[2 * num_layers + 1]

            @pl.when(pl.program_id(0) == 0)
            def _():
                w_scr[...] = compose_weff_T(whT_refs, mhT_refs)

            weff_T = w_scr[...]
        else:
            # Per-tile recompute: tiny vs tb*in*out MACs, and it removes the
            # scratch carry so the batch axis can be "parallel" (v7x: 2 TCs).
            weff_T = compose_weff_T(whT_refs, mhT_refs)

        # Single bf16 MXU matmul per batch tile, f32 accumulation.
        x = x_ref[...].astype(compute_dtype)
        y = lax.dot_general(
            x, weff_T,
            dimension_numbers=(((1,), (0,)), ((), ())),
            preferred_element_type=jnp.float32)
        y_ref[...] = y.astype(y_ref.dtype)

    return kernel


def nac_forward(x, params, *, tb=None, compute_dtype=jnp.bfloat16,
                batch_parallel=False):
    """Fused stacked-NAC forward: one pallas_call, one matmul per batch tile.

    x:      [B, input_size] float32
    params: list of (w_hat, m_hat), each [out_l, in_l] (PyTorch Linear layout).
    """
    B, in_dim = x.shape
    num_layers = len(params)
    out_dim = params[-1][0].shape[0]
    out_pad = _round_up(out_dim, 128)   # lane-dense output stores

    # Batch tile: single fat tile for small B, 512 otherwise (multiple of 8).
    if tb is None:
        tb = B if B <= 512 else 512
    grid = (pl.cdiv(B, tb),)

    # Pre-transpose weights to [in_l, out_l] (canonical MXU layout in-kernel)
    # and zero-pad the last layer's out dim: tanh(0)*sigmoid(0) == 0, so the
    # padded output columns are exactly zero and are sliced off at the end.
    weight_args = []
    weight_specs = []
    for l, (w_hat, m_hat) in enumerate(params):
        whT = jnp.asarray(w_hat, jnp.float32).T
        mhT = jnp.asarray(m_hat, jnp.float32).T
        if l == num_layers - 1 and out_pad != out_dim:
            pad = out_pad - out_dim
            whT = jnp.pad(whT, ((0, 0), (0, pad)))
            mhT = jnp.pad(mhT, ((0, 0), (0, pad)))
        for w in (whT, mhT):
            weight_args.append(w)
            # Full-array block (block == array dims sidesteps (8,128) rule).
            weight_specs.append(pl.BlockSpec(w.shape, lambda i: (0, 0)))

    persist_weights = not batch_parallel
    scratch_shapes = (
        [pltpu.VMEM((in_dim, out_pad), compute_dtype)] if persist_weights else [])

    # Explicit VMEM limit sized to the actual buffers (>= 32 MiB) so v5e's
    # 16 MiB default doesn't force tiny tiles; generous headroom, capped.
    itemsize = jnp.dtype(x.dtype).itemsize
    cbytes = jnp.dtype(compute_dtype).itemsize
    est = (2 * tb * in_dim * itemsize          # x, double-buffered
           + 2 * tb * out_pad * itemsize       # y, double-buffered
           + sum(2 * w.size * 4 for w in weight_args)   # weight inputs
           + in_dim * out_pad * cbytes)        # W_eff^T scratch
    vmem_limit = int(min(max(3 * est, 32 * 1024 * 1024), 100 * 1024 * 1024))

    y_padded = pl.pallas_call(
        build_nac_fused_kernel(num_layers, compute_dtype, persist_weights),
        out_shape=jax.ShapeDtypeStruct((B, out_pad), x.dtype),
        grid=grid,
        in_specs=[pl.BlockSpec((tb, in_dim), lambda i: (i, 0))] + weight_specs,
        out_specs=pl.BlockSpec((tb, out_pad), lambda i: (i, 0)),
        scratch_shapes=scratch_shapes,
        compiler_params=pltpu.CompilerParams(
            # "arbitrary" is REQUIRED when the W_eff scratch is carried across
            # tiles; "parallel" only with per-tile recompute (batch_parallel).
            dimension_semantics=(
                ("parallel",) if batch_parallel else ("arbitrary",)),
            vmem_limit_bytes=vmem_limit,
        ),
    )(x, *weight_args)

    return y_padded[:, :out_dim]


def init_nac_params(key, input_size, hidden_size, output_size, num_layers):
    """Deterministic kaiming-uniform-like init for each layer's W_hat / M_hat."""
    params = []
    for i in range(num_layers):
        in_dim = input_size if i == 0 else hidden_size
        out_dim = output_size if i == num_layers - 1 else hidden_size
        key, k1, k2 = jax.random.split(key, 3)
        bound = math.sqrt(6.0 / in_dim)
        w_hat = jax.random.uniform(k1, (out_dim, in_dim), jnp.float32, -bound, bound)
        m_hat = jax.random.uniform(k2, (out_dim, in_dim), jnp.float32, -bound, bound)
        params.append((w_hat, m_hat))
    return params


def nac_forward_ref(x, params):
    """Pure-JAX f32 reference for correctness check."""
    h = x
    for (w_hat, m_hat) in params:
        w = jnp.tanh(w_hat) * jax.nn.sigmoid(m_hat)
        h = h @ w.T
    return h


if __name__ == "__main__":
    input_size, hidden_size, output_size, num_layers = 32, 32, 16, 3

    key = jax.random.PRNGKey(0)
    key, kx1, kx2 = jax.random.split(key, 3)
    params = init_nac_params(key, input_size, hidden_size, output_size, num_layers)

    # bf16 MXU operands -> tolerance-based check (low-order bits differ vs f32).
    tol = dict(atol=2e-2, rtol=2e-2)

    # Case 1: small batch, single tile, persistent-weight path ("arbitrary").
    x1 = jax.random.normal(kx1, (8, input_size), jnp.float32)
    y1 = jax.block_until_ready(nac_forward(x1, params))
    y1_ref = nac_forward_ref(x1, params)
    assert y1.shape == (8, output_size)
    assert jnp.allclose(y1, y1_ref, **tol), "mismatch vs reference (case 1)"

    # Case 2: multi-tile grid exercising the scratch carry (grid of 3), plus
    # the batch_parallel (per-tile recompute, "parallel") variant.
    x2 = jax.random.normal(kx2, (48, input_size), jnp.float32)
    y2_ref = nac_forward_ref(x2, params)
    y2a = jax.block_until_ready(nac_forward(x2, params, tb=16))
    y2b = jax.block_until_ready(nac_forward(x2, params, tb=16, batch_parallel=True))
    assert y2a.shape == (48, output_size)
    assert jnp.allclose(y2a, y2_ref, **tol), "mismatch vs reference (case 2, carry)"
    assert jnp.allclose(y2b, y2_ref, **tol), "mismatch vs reference (case 2, parallel)"

    print("KERNEL_OK")
</pallas_src>

<mosaic_0001>
module attributes {stable_mosaic.version = 11 : i64} {
  func.func @kernel(%arg0: i32, %arg1: memref<8x32xf32, #tpu.memory_space<vmem>>, %arg2: memref<32x32xf32, #tpu.memory_space<vmem>>, %arg3: memref<32x32xf32, #tpu.memory_space<vmem>>, %arg4: memref<32x32xf32, #tpu.memory_space<vmem>>, %arg5: memref<32x32xf32, #tpu.memory_space<vmem>>, %arg6: memref<32x128xf32, #tpu.memory_space<vmem>>, %arg7: memref<32x128xf32, #tpu.memory_space<vmem>>, %arg8: memref<8x128xf32, #tpu.memory_space<vmem>>, %arg9: memref<32x128xbf16, #tpu.memory_space<vmem>>) attributes {dimension_semantics = [#tpu.dimension_semantics<arbitrary>], iteration_bounds = array<i64: 1>, scalar_prefetch = 0 : i64, scratch_operands = 1 : i64, tpu.core_type = #tpu.core_type<tc>, window_params = [{transform_indices = @transform_0, window_bounds = array<i64: 8, 32>}, {pipeline_mode = #tpu.pipeline_mode<synchronous>, transform_indices = @transform_1, window_bounds = array<i64: 32, 32>}, {pipeline_mode = #tpu.pipeline_mode<synchronous>, transform_indices = @transform_2, window_bounds = array<i64: 32, 32>}, {pipeline_mode = #tpu.pipeline_mode<synchronous>, transform_indices = @transform_3, window_bounds = array<i64: 32, 32>}, {pipeline_mode = #tpu.pipeline_mode<synchronous>, transform_indices = @transform_4, window_bounds = array<i64: 32, 32>}, {pipeline_mode = #tpu.pipeline_mode<synchronous>, transform_indices = @transform_5, window_bounds = array<i64: 32, 128>}, {pipeline_mode = #tpu.pipeline_mode<synchronous>, transform_indices = @transform_6, window_bounds = array<i64: 32, 128>}, {transform_indices = @transform_7, window_bounds = array<i64: 8, 128>}]} {
    %c0_i32 = arith.constant 0 : i32
    %0 = arith.cmpi eq, %arg0, %c0_i32 : i32
    %1 = arith.extui %0 : i1 to i32
    %c0_i32_0 = arith.constant 0 : i32
    %2 = arith.cmpi ne, %1, %c0_i32_0 : i32
    scf.if %2 {
      %c0_6 = arith.constant 0 : index
      %c0_7 = arith.constant 0 : index
      %8 = vector.load %arg2[%c0_6, %c0_7] : memref<32x32xf32, #tpu.memory_space<vmem>>, vector<32x32xf32>
      %c0_8 = arith.constant 0 : index
      %c0_9 = arith.constant 0 : index
      %9 = vector.load %arg3[%c0_8, %c0_9] : memref<32x32xf32, #tpu.memory_space<vmem>>, vector<32x32xf32>
      %10 = math.tanh %8 : vector<32x32xf32>
      %cst_10 = arith.constant 5.000000e-01 : f32
      %11 = vector.broadcast %cst_10 : f32 to vector<32x32xf32>
      %12 = arith.mulf %11, %9 : vector<32x32xf32>
      %13 = math.tanh %12 : vector<32x32xf32>
      %cst_11 = arith.constant 5.000000e-01 : f32
      %14 = vector.broadcast %cst_11 : f32 to vector<32x32xf32>
      %15 = arith.mulf %14, %13 : vector<32x32xf32>
      %cst_12 = arith.constant 5.000000e-01 : f32
      %16 = vector.broadcast %cst_12 : f32 to vector<32x32xf32>
      %17 = arith.addf %15, %16 : vector<32x32xf32>
      %18 = arith.mulf %10, %17 : vector<32x32xf32>
      %c0_13 = arith.constant 0 : index
      %c0_14 = arith.constant 0 : index
      %19 = vector.load %arg4[%c0_13, %c0_14] : memref<32x32xf32, #tpu.memory_space<vmem>>, vector<32x32xf32>
      %c0_15 = arith.constant 0 : index
      %c0_16 = arith.constant 0 : index
      %20 = vector.load %arg5[%c0_15, %c0_16] : memref<32x32xf32, #tpu.memory_space<vmem>>, vector<32x32xf32>
      %21 = math.tanh %19 : vector<32x32xf32>
      %cst_17 = arith.constant 5.000000e-01 : f32
      %22 = vector.broadcast %cst_17 : f32 to vector<32x32xf32>
      %23 = arith.mulf %22, %20 : vector<32x32xf32>
      %24 = math.tanh %23 : vector<32x32xf32>
      %cst_18 = arith.constant 5.000000e-01 : f32
      %25 = vector.broadcast %cst_18 : f32 to vector<32x32xf32>
      %26 = arith.mulf %25, %24 : vector<32x32xf32>
      %cst_19 = arith.constant 5.000000e-01 : f32
      %27 = vector.broadcast %cst_19 : f32 to vector<32x32xf32>
      %28 = arith.addf %26, %27 : vector<32x32xf32>
      %29 = arith.mulf %21, %28 : vector<32x32xf32>
      %cst_20 = arith.constant dense<0.000000e+00> : vector<32x32xf32>
      %30 = tpu.matmul %18, %29, %cst_20 {dimension_numbers = #tpu.dot_dimension_numbers<[1], [0], [0], [1], [0, 0, 1, 1], [], []>} : vector<32x32xf32>, vector<32x32xf32>, vector<32x32xf32> -> vector<32x32xf32>
      %c0_21 = arith.constant 0 : index
      %c0_22 = arith.constant 0 : index
      %31 = vector.load %arg6[%c0_21, %c0_22] : memref<32x128xf32, #tpu.memory_space<vmem>>, vector<32x128xf32>
      %c0_23 = arith.constant 0 : index
      %c0_24 = arith.constant 0 : index
      %32 = vector.load %arg7[%c0_23, %c0_24] : memref<32x128xf32, #tpu.memory_space<vmem>>, vector<32x128xf32>
      %33 = math.tanh %31 : vector<32x128xf32>
      %cst_25 = arith.constant 5.000000e-01 : f32
      %34 = vector.broadcast %cst_25 : f32 to vector<32x128xf32>
      %35 = arith.mulf %34, %32 : vector<32x128xf32>
      %36 = math.tanh %35 : vector<32x128xf32>
      %cst_26 = arith.constant 5.000000e-01 : f32
      %37 = vector.broadcast %cst_26 : f32 to vector<32x128xf32>
      %38 = arith.mulf %37, %36 : vector<32x128xf32>
      %cst_27 = arith.constant 5.000000e-01 : f32
      %39 = vector.broadcast %cst_27 : f32 to vector<32x128xf32>
      %40 = arith.addf %38, %39 : vector<32x128xf32>
      %41 = arith.mulf %33, %40 : vector<32x128xf32>
      %cst_28 = arith.constant dense<0.000000e+00> : vector<32x128xf32>
      %42 = tpu.matmul %30, %41, %cst_28 {dimension_numbers = #tpu.dot_dimension_numbers<[1], [0], [0], [1], [0, 0, 1, 1], [], []>} : vector<32x32xf32>, vector<32x128xf32>, vector<32x128xf32> -> vector<32x128xf32>
      %43 = arith.truncf %42 : vector<32x128xf32> to vector<32x128xbf16>
      %c0_29 = arith.constant 0 : index
      %c0_30 = arith.constant 0 : index
      %44 = vector.load %arg9[%c0_29, %c0_30] : memref<32x128xbf16, #tpu.memory_space<vmem>>, vector<32x128xbf16>
      tpu.vector_store %arg9[%c0_29, %c0_30], %43 {strides = array<i32>} : memref<32x128xbf16, #tpu.memory_space<vmem>>, vector<32x128xbf16>,
    } else {
    }
    %c0 = arith.constant 0 : index
    %c0_1 = arith.constant 0 : index
    %3 = vector.load %arg9[%c0, %c0_1] : memref<32x128xbf16, #tpu.memory_space<vmem>>, vector<32x128xbf16>
    %c0_2 = arith.constant 0 : index
    %c0_3 = arith.constant 0 : index
    %4 = vector.load %arg1[%c0_2, %c0_3] : memref<8x32xf32, #tpu.memory_space<vmem>>, vector<8x32xf32>
    %5 = arith.truncf %4 : vector<8x32xf32> to vector<8x32xbf16>
    %cst = arith.constant dense<0.000000e+00> : vector<8x128xf32>
    %6 = tpu.matmul %5, %3, %cst {dimension_numbers = #tpu.dot_dimension_numbers<[1], [0], [0], [1], [0, 0, 1, 1], [], []>} : vector<8x32xbf16>, vector<32x128xbf16>, vector<8x128xf32> -> vector<8x128xf32>
    %c0_4 = arith.constant 0 : index
    %c0_5 = arith.constant 0 : index
    %7 = vector.load %arg8[%c0_4, %c0_5] : memref<8x128xf32, #tpu.memory_space<vmem>>, vector<8x128xf32>
    tpu.vector_store %arg8[%c0_4, %c0_5], %6 {strides = array<i32>} : memref<8x128xf32, #tpu.memory_space<vmem>>, vector<8x128xf32>,
    return
  }
  func.func @transform_0(%arg0: i32) -> (i32, i32) {
    %c0_i32 = arith.constant 0 : i32
    %c0_i32_0 = arith.constant 0 : i32
    return %arg0, %c0_i32 : i32, i32
  }
  func.func @transform_1(%arg0: i32) -> (i32, i32) {
    %c0_i32 = arith.constant 0 : i32
    %c0_i32_0 = arith.constant 0 : i32
    %c0_i32_1 = arith.constant 0 : i32
    return %c0_i32, %c0_i32_0 : i32, i32
  }
  func.func @transform_2(%arg0: i32) -> (i32, i32) {
    %c0_i32 = arith.constant 0 : i32
    %c0_i32_0 = arith.constant 0 : i32
    %c0_i32_1 = arith.constant 0 : i32
    return %c0_i32, %c0_i32_0 : i32, i32
  }
  func.func @transform_3(%arg0: i32) -> (i32, i32) {
    %c0_i32 = arith.constant 0 : i32
    %c0_i32_0 = arith.constant 0 : i32
    %c0_i32_1 = arith.constant 0 : i32
    return %c0_i32, %c0_i32_0 : i32, i32
  }
  func.func @transform_4(%arg0: i32) -> (i32, i32) {
    %c0_i32 = arith.constant 0 : i32
    %c0_i32_0 = arith.constant 0 : i32
    %c0_i32_1 = arith.constant 0 : i32
    return %c0_i32, %c0_i32_0 : i32, i32
  }
  func.func @transform_5(%arg0: i32) -> (i32, i32) {
    %c0_i32 = arith.constant 0 : i32
    %c0_i32_0 = arith.constant 0 : i32
    %c0_i32_1 = arith.constant 0 : i32
    return %c0_i32, %c0_i32_0 : i32, i32
  }
  func.func @transform_6(%arg0: i32) -> (i32, i32) {
    %c0_i32 = arith.constant 0 : i32
    %c0_i32_0 = arith.constant 0 : i32
    %c0_i32_1 = arith.constant 0 : i32
    return %c0_i32, %c0_i32_0 : i32, i32
  }
  func.func @transform_7(%arg0: i32) -> (i32, i32) {
    %c0_i32 = arith.constant 0 : i32
    %c0_i32_0 = arith.constant 0 : i32
    return %arg0, %c0_i32 : i32, i32
  }
}

</mosaic_0001>

<llo_original>
// kernel: tpu_custom_call.1
$region0: #{tpu_custom_call.1}
  #allocation0 [shape = 'u32[]', space=smem, size = 0x4, offset = 0x4, fixed_abs, tag = 'smem constant byte address 0x4 - core index']
  #allocation1 [shape = 'u32[72,128]{1,0:T(1,128)}', space=vmem, size = 0x9000, scoped, tag = 'internal scratch']
  #allocation2 [shape = 'bf16[32,128]{1,0:T(8,128)(2,1)}', space=vmem, size = 0x2000, scoped, tag = 'scratch operand']
  %s0 = inlined_call_operand.hbm [shape: f32[8,32], index: 0, kind: input, shape index: {}]
  %s1 = inlined_call_operand.hbm [shape: f32[32,32], index: 1, kind: input, shape index: {}]
  %s2 = inlined_call_operand.hbm [shape: f32[32,32], index: 2, kind: input, shape index: {}]
  %s3 = inlined_call_operand.hbm [shape: f32[32,32], index: 3, kind: input, shape index: {}]
  %s4 = inlined_call_operand.hbm [shape: f32[32,32], index: 4, kind: input, shape index: {}]
  %s5 = inlined_call_operand.hbm [shape: f32[32,128], index: 5, kind: input, shape index: {}]
  %s6 = inlined_call_operand.hbm [shape: f32[32,128], index: 6, kind: input, shape index: {}]
  %s7 = inlined_call_operand.hbm [shape: f32[8,128], index: 7, kind: output, shape index: {}]
  %s8 = sld [smem:[#allocation0]]
  $region70: #{tpu_custom_call.1} parent=0
    _
  %s10 = ssub.s32 1, %s8
  %s11 = scalar_select 0, %s10, %s8
  $region1: #{tpu_custom_call.1} parent=0
    #allocation3 [shape = 'u8[4096]{0}', space=vmem, size = 0x1000, scoped, tag = 'input window, operand 0, single buffered']
    #allocation4 [shape = 's32[1]{0}', space=sflag, size = 0x4, scoped, tag = 'scoped memory for tpu_custom_call.1']
    #allocation5 [shape = 's32[1]{0}', space=sflag, size = 0x4, scoped, tag = 'scoped memory for tpu_custom_call.1']
    #allocation6 [shape = 'u8[16384]{0}', space=vmem, size = 0x4000, scoped, tag = 'input window, operand 1, single buffered']
    #allocation7 [shape = 's32[1]{0}', space=sflag, size = 0x4, scoped, tag = 'scoped memory for tpu_custom_call.1']
    #allocation8 [shape = 'u8[16384]{0}', space=vmem, size = 0x4000, scoped, tag = 'input window, operand 2, single buffered']
    #allocation9 [shape = 'u8[16384]{0}', space=vmem, size = 0x4000, scoped, tag = 'input window, operand 3, single buffered']
    #allocation10 [shape = 's32[1]{0}', space=sflag, size = 0x4, scoped, tag = 'scoped memory for tpu_custom_call.1']
    #allocation11 [shape = 'u8[16384]{0}', space=vmem, size = 0x4000, scoped, tag = 'input window, operand 4, single buffered']
    #allocation12 [shape = 'u8[16384]{0}', space=vmem, size = 0x4000, scoped, tag = 'input window, operand 5, single buffered']
    #allocation13 [shape = 's32[1]{0}', space=sflag, size = 0x4, scoped, tag = 'scoped memory for tpu_custom_call.1']
    #allocation14 [shape = 'u8[16384]{0}', space=vmem, size = 0x4000, scoped, tag = 'input window, operand 6, single buffered']
    #allocation15 [shape = 'u8[4096]{0}', space=vmem, size = 0x1000, scoped, tag = 'output window, operand 0, single buffered']
    %12 = vsyncpa [#allocation4], 0
    %13 = vsyncpa [#allocation7], 0
    %14 = vsyncpa [#allocation10], 0
    %15 = vsyncpa [#allocation13], 0
    %16 = vsyncpa [#allocation5], 0
    // Predicated region
    $region2: #{tpu_custom_call.1} parent=1 // pred_check
      _
    $region3: #{tpu_custom_call.1} parent=1 // pred_check_branch
      %18 = sbr.rel (0) target = $region5
    $region4: #{tpu_custom_call.1} parent=1 // pred_region
      %20 = vsyncadd [#allocation4], 0
      %s22 = sshll.u32 %s0, 4
      %s23 = int_to_ptr.hbm [resolvable:$true] %s22
      %s24 = sshll.u32 [#allocation3], 4
      %s25 = int_to_ptr.vmem [resolvable:$true] %s24
      %27 = dma.hbm_to_vmem [thread:$0]  %s23, 128, %s25, [#allocation4]
    $region5: #{tpu_custom_call.1} parent=1 // pred_fallthru
      _
    // Predicated region
    $region6: #{tpu_custom_call.1} parent=1 // pred_check
      _
    $region7: #{tpu_custom_call.1} parent=1 // pred_check_branch
      %29 = sbr.rel (0) target = $region9
    $region8: #{tpu_custom_call.1} parent=1 // pred_region
      %31 = vsyncadd [#allocation7], 0
      %s32 = sshll.u32 %s1, 4
      %s33 = int_to_ptr.hbm [resolvable:$true] %s32
      %s34 = sshll.u32 [#allocation6], 4
      %s35 = int_to_ptr.vmem [resolvable:$true] %s34
      %40 = dma.hbm_to_vmem [thread:$0]  %s33, 512, %s35, [#allocation7], 128, 128, 8
    $region9: #{tpu_custom_call.1} parent=1 // pred_fallthru
      _
    // Predicated region
    $region10: #{tpu_custom_call.1} parent=1 // pred_check
      _
    $region11: #{tpu_custom_call.1} parent=1 // pred_check_branch
      %42 = sbr.rel (0) target = $region13
    $region12: #{tpu_custom_call.1} parent=1 // pred_region
      %44 = vsyncadd [#allocation7], 0
      %s45 = sshll.u32 %s2, 4
      %s46 = int_to_ptr.hbm [resolvable:$true] %s45
      %s47 = sshll.u32 [#allocation8], 4
      %s48 = int_to_ptr.vmem [resolvable:$true] %s47
      %53 = dma.hbm_to_vmem [thread:$0]  %s46, 512, %s48, [#allocation7], 128, 128, 8
    $region13: #{tpu_custom_call.1} parent=1 // pred_fallthru
      _
    // Predicated region
    $region14: #{tpu_custom_call.1} parent=1 // pred_check
      _
    $region15: #{tpu_custom_call.1} parent=1 // pred_check_branch
      %55 = sbr.rel (0) target = $region17
    $region16: #{tpu_custom_call.1} parent=1 // pred_region
      %57 = vsyncadd [#allocation10], 0
      %s58 = sshll.u32 %s3, 4
      %s59 = int_to_ptr.hbm [resolvable:$true] %s58
      %s60 = sshll.u32 [#allocation9], 4
      %s61 = int_to_ptr.vmem [resolvable:$true] %s60
      %66 = dma.hbm_to_vmem [thread:$0]  %s59, 512, %s61, [#allocation10], 128, 128, 8
    $region17: #{tpu_custom_call.1} parent=1 // pred_fallthru
      _
    // Predicated region
    $region18: #{tpu_custom_call.1} parent=1 // pred_check
      _
    $region19: #{tpu_custom_call.1} parent=1 // pred_check_branch
      %68 = sbr.rel (0) target = $region21
    $region20: #{tpu_custom_call.1} parent=1 // pred_region
      %70 = vsyncadd [#allocation10], 0
      %s71 = sshll.u32 %s4, 4
      %s72 = int_to_ptr.hbm [resolvable:$true] %s71
      %s73 = sshll.u32 [#allocation11], 4
      %s74 = int_to_ptr.vmem [resolvable:$true] %s73
      %79 = dma.hbm_to_vmem [thread:$0]  %s72, 512, %s74, [#allocation10], 128, 128, 8
    $region21: #{tpu_custom_call.1} parent=1 // pred_fallthru
      _
    // Predicated region
    $region22: #{tpu_custom_call.1} parent=1 // pred_check
      _
    $region23: #{tpu_custom_call.1} parent=1 // pred_check_branch
      %81 = sbr.rel (0) target = $region25
    $region24: #{tpu_custom_call.1} parent=1 // pred_region
      %83 = vsyncadd [#allocation13], 0
      %s84 = sshll.u32 %s5, 4
      %s85 = int_to_ptr.hbm [resolvable:$true] %s84
      %s86 = sshll.u32 [#allocation12], 4
      %s87 = int_to_ptr.vmem [resolvable:$true] %s86
      %92 = dma.hbm_to_vmem [thread:$0]  %s85, 512, %s87, [#allocation13], 128, 128, 8
    $region25: #{tpu_custom_call.1} parent=1 // pred_fallthru
      _
    // Predicated region
    $region26: #{tpu_custom_call.1} parent=1 // pred_check
      _
    $region27: #{tpu_custom_call.1} parent=1 // pred_check_branch
      %94 = sbr.rel (0) target = $region29
    $region28: #{tpu_custom_call.1} parent=1 // pred_region
      %96 = vsyncadd [#allocation13], 0
      %s97 = sshll.u32 %s6, 4
      %s98 = int_to_ptr.hbm [resolvable:$true] %s97
      %s99 = sshll.u32 [#allocation14], 4
      %s100 = int_to_ptr.vmem [resolvable:$true] %s99
      %105 = dma.hbm_to_vmem [thread:$0]  %s98, 512, %s100, [#allocation13], 128, 128, 8
    $region29: #{tpu_custom_call.1} parent=1 // pred_fallthru
      _
    // Predicated region
    $region30: #{tpu_custom_call.1} parent=1 // pred_check
      _
    $region31: #{tpu_custom_call.1} parent=1 // pred_check_branch
      %107 = sbr.rel (0) target = $region33
    $region32: #{tpu_custom_call.1} parent=1 // pred_region
      %109 = dma.done [#allocation4], 128
    $region33: #{tpu_custom_call.1} parent=1 // pred_fallthru
      _
    // Predicated region
    $region34: #{tpu_custom_call.1} parent=1 // pred_check
      _
    $region35: #{tpu_custom_call.1} parent=1 // pred_check_branch
      %111 = sbr.rel (0) target = $region37
    $region36: #{tpu_custom_call.1} parent=1 // pred_region
      %113 = dma.done [#allocation7], 512
    $region37: #{tpu_custom_call.1} parent=1 // pred_fallthru
      _
    // Predicated region
    $region38: #{tpu_custom_call.1} parent=1 // pred_check
      _
    $region39: #{tpu_custom_call.1} parent=1 // pred_check_branch
      %115 = sbr.rel (0) target = $region41
    $region40: #{tpu_custom_call.1} parent=1 // pred_region
      %117 = dma.done [#allocation7], 512
    $region41: #{tpu_custom_call.1} parent=1 // pred_fallthru
      _
    // Predicated region
    $region42: #{tpu_custom_call.1} parent=1 // pred_check
      _
    $region43: #{tpu_custom_call.1} parent=1 // pred_check_branch
      %119 = sbr.rel (0) target = $region45
    $region44: #{tpu_custom_call.1} parent=1 // pred_region
      %121 = dma.done [#allocation10], 512
    $region45: #{tpu_custom_call.1} parent=1 // pred_fallthru
      _
    // Predicated region
    $region46: #{tpu_custom_call.1} parent=1 // pred_check
      _
    $region47: #{tpu_custom_call.1} parent=1 // pred_check_branch
      %123 = sbr.rel (0) target = $region49
    $region48: #{tpu_custom_call.1} parent=1 // pred_region
      %125 = dma.done [#allocation10], 512
    $region49: #{tpu_custom_call.1} parent=1 // pred_fallthru
      _
    // Predicated region
    $region50: #{tpu_custom_call.1} parent=1 // pred_check
      _
    $region51: #{tpu_custom_call.1} parent=1 // pred_check_branch
      %127 = sbr.rel (0) target = $region53
    $region52: #{tpu_custom_call.1} parent=1 // pred_region
      %129 = dma.done [#allocation13], 512
    $region53: #{tpu_custom_call.1} parent=1 // pred_fallthru
      _
    // Predicated region
    $region54: #{tpu_custom_call.1} parent=1 // pred_check
      _
    $region55: #{tpu_custom_call.1} parent=1 // pred_check_branch
      %131 = sbr.rel (0) target = $region57
    $region56: #{tpu_custom_call.1} parent=1 // pred_region
      %133 = dma.done [#allocation13], 512
    $region57: #{tpu_custom_call.1} parent=1 // pred_fallthru
      _
    %p135 = scmp.eq.s32.totalorder 0, 0
    // Predicated region
    $region58: #{tpu_custom_call.1} parent=1 // pred_check
      %p136 = pneg %p135
    $region59: #{tpu_custom_call.1} parent=1 // pred_check_branch
      %138 = sbr.rel (%p136) target = $region61
    $region60: #{tpu_custom_call.1} parent=1 // pred_region
      %v139 = vld [vmem:[#allocation6] sm:$0xff]
      %v140 = vld [vmem:[#allocation6 + $0x8] sm:$0xff]
      %v141 = vld [vmem:[#allocation6 + $0x10] sm:$0xff]
      %v142 = vld [vmem:[#allocation6 + $0x18] sm:$0xff]
      %v143 = vld [vmem:[#allocation8] sm:$0xff]
      %v144 = vld [vmem:[#allocation8 + $0x8] sm:$0xff]
      %v145 = vld [vmem:[#allocation8 + $0x10] sm:$0xff]
      %v146 = vld [vmem:[#allocation8 + $0x18] sm:$0xff]
      %v147 = vtanh.pop %v139
      %v148 = vtanh.pop %v140
      %v149 = vtanh.pop %v141
      %v150 = vtanh.pop %v142
      %v151 = vmul.f32 %v143, 0.5
      %v152 = vmul.f32 %v144, 0.5
      %v153 = vmul.f32 %v145, 0.5
      %v154 = vmul.f32 %v146, 0.5
      %v155 = vtanh.pop %v151
      %v156 = vtanh.pop %v152
      %v157 = vtanh.pop %v153
      %v158 = vtanh.pop %v154
      %v159 = vmul.f32 %v155, 0.5
      %v160 = vmul.f32 %v156, 0.5
      %v161 = vmul.f32 %v157, 0.5
      %v162 = vmul.f32 %v158, 0.5
      %v163 = vadd.f32 %v159, 0.5
      %v164 = vadd.f32 %v160, 0.5
      %v165 = vadd.f32 %v161, 0.5
      %v166 = vadd.f32 %v162, 0.5
      %v167 = vmul.f32 %v147, %v163
      %v168 = vmul.f32 %v148, %v164
      %v169 = vmul.f32 %v149, %v165
      %v170 = vmul.f32 %v150, %v166
      %v171 = vld [vmem:[#allocation9] sm:$0xff]
      %v172 = vld [vmem:[#allocation9 + $0x8] sm:$0xff]
      %v173 = vld [vmem:[#allocation9 + $0x10] sm:$0xff]
      %v174 = vld [vmem:[#allocation9 + $0x18] sm:$0xff]
      %v175 = vld [vmem:[#allocation11] sm:$0xff]
      %v176 = vld [vmem:[#allocation11 + $0x8] sm:$0xff]
      %v177 = vld [vmem:[#allocation11 + $0x10] sm:$0xff]
      %v178 = vld [vmem:[#allocation11 + $0x18] sm:$0xff]
      %v179 = vtanh.pop %v171
      %v180 = vtanh.pop %v172
      %v181 = vtanh.pop %v173
      %v182 = vtanh.pop %v174
      %v183 = vmul.f32 %v175, 0.5
      %v184 = vmul.f32 %v176, 0.5
      %v185 = vmul.f32 %v177, 0.5
      %v186 = vmul.f32 %v178, 0.5
      %v187 = vtanh.pop %v183
      %v188 = vtanh.pop %v184
      %v189 = vtanh.pop %v185
      %v190 = vtanh.pop %v186
      %v191 = vmul.f32 %v187, 0.5
      %v192 = vmul.f32 %v188, 0.5
      %v193 = vmul.f32 %v189, 0.5
      %v194 = vmul.f32 %v190, 0.5
      %v195 = vadd.f32 %v191, 0.5
      %v196 = vadd.f32 %v192, 0.5
      %v197 = vadd.f32 %v193, 0.5
      %v198 = vadd.f32 %v194, 0.5
      %v199 = vmul.f32 %v179, %v195
      %v200 = vmul.f32 %v180, %v196
      %v201 = vmul.f32 %v181, %v197
      %v202 = vmul.f32 %v182, %v198
      %vm203 = vcmask 261120
      %v205 = vsel %vm203, %v167, 0
      %v208 = vsel %vm203, %v168, 0
      %v211 = vsel %vm203, %v169, 0
      %v214 = vsel %vm203, %v170, 0
      %216 = vmatpush.msra.mxu0 0.0
      %217 = vmatpush.msra.mxu0 0.0
      %218 = vmatpush.msra.mxu0 0.0
      %219 = vmatpush.msra.mxu0 0.0
      %220 = vmatpush.msra.mxu0 0.0
      %221 = vmatpush.msra.mxu0 0.0
      %222 = vmatpush.msra.mxu0 0.0
      %223 = vmatpush.msra.mxu0 0.0
      %224 = vmatpush.msra.mxu0 0.0
      %225 = vmatpush.msra.mxu0 0.0
      %226 = vmatpush.msra.mxu0 0.0
      %227 = vmatpush.msra.mxu0 0.0
      %228 = vmatpush.msra.mxu0 %v202
      %229 = vmatpush.msra.mxu0 %v201
      %230 = vmatpush.msra.mxu0 %v200
      %231 = vmatpush.msra.mxu0 %v199
      %232 = vmatmul.f32.gmra.mxu0 %v205
      %v233 = vpop.f32.mrf.mxu0
      %v234 = vadd.f32 0.0, %v233
      %235 = vmatmul.f32.gmra.mxu0 %v208
      %v236 = vpop.f32.mrf.mxu0
      %v237 = vadd.f32 0.0, %v236
      %238 = vmatmul.f32.gmra.mxu0 %v211
      %v239 = vpop.f32.mrf.mxu0
      %v240 = vadd.f32 0.0, %v239
      %241 = vmatmul.f32.gmra.mxu0 %v214
      %v242 = vpop.f32.mrf.mxu0
      %v243 = vadd.f32 0.0, %v242
      %244 = vdwg.mxu0
      %v245 = vld [vmem:[#allocation12] sm:$0xff]
      %v246 = vld [vmem:[#allocation12 + $0x8] sm:$0xff]
      %v247 = vld [vmem:[#allocation12 + $0x10] sm:$0xff]
      %v248 = vld [vmem:[#allocation12 + $0x18] sm:$0xff]
      %v249 = vld [vmem:[#allocation14] sm:$0xff]
      %v250 = vld [vmem:[#allocation14 + $0x8] sm:$0xff]
      %v251 = vld [vmem:[#allocation14 + $0x10] sm:$0xff]
      %v252 = vld [vmem:[#allocation14 + $0x18] sm:$0xff]
      %v253 = vtanh.pop %v245
      %v254 = vtanh.pop %v246
      %v255 = vtanh.pop %v247
      %v256 = vtanh.pop %v248
      %v257 = vmul.f32 %v249, 0.5
      %v258 = vmul.f32 %v250, 0.5
      %v259 = vmul.f32 %v251, 0.5
      %v260 = vmul.f32 %v252, 0.5
      %v261 = vtanh.pop %v257
      %v262 = vtanh.pop %v258
      %v263 = vtanh.pop %v259
      %v264 = vtanh.pop %v260
      %v265 = vmul.f32 %v261, 0.5
      %v266 = vmul.f32 %v262, 0.5
      %v267 = vmul.f32 %v263, 0.5
      %v268 = vmul.f32 %v264, 0.5
      %v269 = vadd.f32 %v265, 0.5
      %v270 = vadd.f32 %v266, 0.5
      %v271 = vadd.f32 %v267, 0.5
      %v272 = vadd.f32 %v268, 0.5
      %v273 = vmul.f32 %v253, %v269
      %v274 = vmul.f32 %v254, %v270
      %v275 = vmul.f32 %v255, %v271
      %v276 = vmul.f32 %v256, %v272
      %v278 = vsel %vm203, %v234, 0
      %v281 = vsel %vm203, %v237, 0
      %v284 = vsel %vm203, %v240, 0
      %v287 = vsel %vm203, %v243, 0
      %289 = vmatpush.msra.mxu0 0.0
      %290 = vmatpush.msra.mxu0 0.0
      %291 = vmatpush.msra.mxu0 0.0
      %292 = vmatpush.msra.mxu0 0.0
      %293 = vmatpush.msra.mxu0 0.0
      %294 = vmatpush.msra.mxu0 0.0
      %295 = vmatpush.msra.mxu0 0.0
      %296 = vmatpush.msra.mxu0 0.0
      %297 = vmatpush.msra.mxu0 0.0
      %298 = vmatpush.msra.mxu0 0.0
      %299 = vmatpush.msra.mxu0 0.0
      %300 = vmatpush.msra.mxu0 0.0
      %301 = vmatpush.msra.mxu0 %v276
      %302 = vmatpush.msra.mxu0 %v275
      %303 = vmatpush.msra.mxu0 %v274
      %304 = vmatpush.msra.mxu0 %v273
      %305 = vmatmul.f32.gmra.mxu0 %v278
      %v306 = vpop.f32.mrf.mxu0
      %v307 = vadd.f32 0.0, %v306
      %308 = vmatmul.f32.gmra.mxu0 %v281
      %v309 = vpop.f32.mrf.mxu0
      %v310 = vadd.f32 0.0, %v309
      %311 = vmatmul.f32.gmra.mxu0 %v284
      %v312 = vpop.f32.mrf.mxu0
      %v313 = vadd.f32 0.0, %v312
      %314 = vmatmul.f32.gmra.mxu0 %v287
      %v315 = vpop.f32.mrf.mxu0
      %v316 = vadd.f32 0.0, %v315
      %317 = vdwg.mxu0
      %v318 = vpack.c.bf16 %v307, %v307
      %v319 = vpack.c.bf16 %v310, %v310
      %v320 = vpack.c.bf16 %v313, %v313
      %v321 = vpack.c.bf16 %v316, %v316
      %322 = vst [vmem:[#allocation2] sm:$0xf] %v318
      %323 = vst [vmem:[#allocation2 + $0x4] sm:$0xf] %v319
      %324 = vst [vmem:[#allocation2 + $0x8] sm:$0xf] %v320
      %325 = vst [vmem:[#allocation2 + $0xc] sm:$0xf] %v321
    $region61: #{tpu_custom_call.1} parent=1 // pred_fallthru
      _
    %v326 = vld [vmem:[#allocation2] sm:$0xf]
    %v327 = vld [vmem:[#allocation2 + $0x4] sm:$0xf]
    %v328 = vld [vmem:[#allocation2 + $0x8] sm:$0xf]
    %v329 = vld [vmem:[#allocation2 + $0xc] sm:$0xf]
    %v330 = vld [vmem:[#allocation3] sm:$0xff]
    %v331 = vpack.c.bf16 %v330, %v330
    %v336 = vunpack.c.l.b16 %v326
    %v337 = vunpack.c.l.b16 %v327
    %v338 = vunpack.c.l.b16 %v328
    %v339 = vunpack.c.l.b16 %v329
    %v340 = vpack.c.b16 %v337, %v336
    %v341 = vpack.c.b16 %v339, %v338
    %vm344 = vcmask 261120
    %v346 = vsel %vm344, %v331, 0
    %348 = vmatpush.bf16.msra.mxu0 0
    %349 = vmatpush.bf16.msra.mxu0 0
    %350 = vmatpush.bf16.msra.mxu0 0
    %351 = vmatpush.bf16.msra.mxu0 0
    %352 = vmatpush.bf16.msra.mxu0 0
    %353 = vmatpush.bf16.msra.mxu0 0
    %354 = vmatpush.bf16.msra.mxu0 %v341
    %355 = vmatpush.bf16.msra.mxu0 %v340
    %356 = vmatmul.bf16.gmra.mxu0 %v346
    %v357 = vpop.f32.mrf.mxu0
    %v358 = vadd.f32 0.0, %v357
    %v359 = vpop.f32.mrf.mxu0
    %360 = vdwg.mxu0
    %361 = vst [vmem:[#allocation15] sm:$0xff] %v358
    // Predicated region
    $region62: #{tpu_custom_call.1} parent=1 // pred_check
      _
    $region63: #{tpu_custom_call.1} parent=1 // pred_check_branch
      %363 = sbr.rel (0) target = $region65
    $region64: #{tpu_custom_call.1} parent=1 // pred_region
      %365 = vsyncadd [#allocation5], 0
      %s367 = sshll.u32 [#allocation15], 4
      %s368 = int_to_ptr.vmem [resolvable:$true] %s367
      %s369 = sshll.u32 %s7, 4
      %s370 = int_to_ptr.hbm [resolvable:$true] %s369
      %372 = dma.vmem_to_hbm [thread:$0]  %s368, 128, %s370, [#allocation5]
    $region65: #{tpu_custom_call.1} parent=1 // pred_fallthru
      _
    // Predicated region
    $region66: #{tpu_custom_call.1} parent=1 // pred_check
      _
    $region67: #{tpu_custom_call.1} parent=1 // pred_check_branch
      %374 = sbr.rel (0) target = $region69
    $region68: #{tpu_custom_call.1} parent=1 // pred_region
      %376 = dma.done [#allocation5], 128
    $region69: #{tpu_custom_call.1} parent=1 // pred_fallthru
      _
    %377 = vsyncpa [#allocation4], 1
    %378 = vsyncpa [#allocation7], 1
    %379 = vsyncpa [#allocation10], 1
    %380 = vsyncpa [#allocation13], 1
    %381 = vsyncpa [#allocation5], 1

</llo_original>
